<compile_context>
chip_gen: v7x
topology: tpu7x:2x2x1
jax: 0.10.0
libtpu: 0.0.40
codegen_flags: <defaults>
</compile_context>

<pallas_src>
import functools

import jax
import jax.numpy as jnp
from jax.experimental import pallas as pl
from jax.experimental.pallas import tpu as pltpu


_VMEM_LIMIT = 32 * 1024 * 1024   # comfortable on v5e/v6e (128 MiB) and v7x (64 MiB physical)
_MAX_TK = 4096                   # cap on K tile so double-buffered A/B blocks stay well under budget
_ACT_DTYPE = jnp.bfloat16        # activation dtype between layers (halves HBM traffic)


def _round_up(x, m):
    return (x + m - 1) // m * m


def _pick_tile(x, candidates):
    for c in candidates:
        if x % c == 0:
            return c
    return x


# ----------------------------------------------------------------------------
# Pallas kernels
# ----------------------------------------------------------------------------

def _matmul_kernel_single(a_ref, b_ref, bias_ref, o_ref, *, relu):
    """Single K-step bf16 @ bf16 matmul: f32 MXU accumulate, fused bias (+ ReLU), one store."""
    out = jnp.dot(a_ref[...], b_ref[...], preferred_element_type=jnp.float32) + bias_ref[...]
    if relu:
        out = jnp.maximum(out, 0.0)
    o_ref[...] = out.astype(o_ref.dtype)


def _matmul_kernel_acc(a_ref, b_ref, bias_ref, o_ref, acc_ref, *, relu):
    """Multi K-step bf16 @ bf16 matmul with an f32 VMEM accumulator; bias (+ ReLU) fused and
    the (possibly bf16) output written once on the last K step."""
    k = pl.program_id(2)

    @pl.when(k == 0)
    def _():
        acc_ref[...] = jnp.zeros_like(acc_ref)

    acc_ref[...] += jnp.dot(a_ref[...], b_ref[...], preferred_element_type=jnp.float32)

    @pl.when(k == pl.num_programs(2) - 1)
    def _():
        out = acc_ref[...] + bias_ref[...]
        if relu:
            out = jnp.maximum(out, 0.0)
        o_ref[...] = out.astype(o_ref.dtype)


def _dwconv_kernel(x_ref, w_ref, b_ref, o_ref, *, KH, KW, OH, OW):
    """Real depthwise conv (stride 1 over the padded input): VPU multiply-accumulate over
    the KH*KW taps with per-channel weights, fused folded-BN bias + ReLU."""
    C = o_ref.shape[-1]
    acc = jnp.zeros((OH, OW, C), jnp.float32)
    for kh in range(KH):
        for kw in range(KW):
            tap = x_ref[0, kh:kh + OH, kw:kw + OW, :].astype(jnp.float32)
            acc = acc + tap * w_ref[kh * KW + kw].astype(jnp.float32)
    o_ref[0] = jnp.maximum(acc + b_ref[0], 0.0).astype(o_ref.dtype)


def _combine_kernel(*refs, nb, relu, has_res):
    """Softmax-weighted sum of nb branch blocks (+ optional residual), optional ReLU.
    Branch weights (f32) live in SMEM; branch arrays come in as separate bf16 VMEM blocks;
    accumulation is f32, store in the output dtype."""
    w_ref = refs[0]
    branches = refs[1:1 + nb]
    o_ref = refs[-1]
    acc = w_ref[0] * branches[0][...].astype(jnp.float32)
    for b in range(1, nb):
        acc = acc + w_ref[b] * branches[b][...].astype(jnp.float32)
    if has_res:
        acc = acc + refs[1 + nb][...].astype(jnp.float32)
    if relu:
        acc = jnp.maximum(acc, 0.0)
    o_ref[...] = acc.astype(o_ref.dtype)


def _avgpool_kernel(x_ref, o_ref):
    # x_ref: (N, H*W, C) -> f32 mean over spatial positions
    o_ref[...] = jnp.mean(x_ref[...].astype(jnp.float32), axis=1)


# ----------------------------------------------------------------------------
# Cached pallas_call builders (shape-specialized, compiled once per shape)
# ----------------------------------------------------------------------------

@functools.lru_cache(maxsize=None)
def _matmul_fn(Mp, Kp, Np, tm, tk, tn, relu, out_dtype):
    nk = Kp // tk
    if nk == 1:
        call = pl.pallas_call(
            functools.partial(_matmul_kernel_single, relu=relu),
            out_shape=jax.ShapeDtypeStruct((Mp, Np), out_dtype),
            grid_spec=pltpu.PrefetchScalarGridSpec(
                num_scalar_prefetch=0,
                grid=(Mp // tm, Np // tn),
                in_specs=[
                    pl.BlockSpec((tm, tk), lambda i, j: (i, 0)),
                    pl.BlockSpec((tk, tn), lambda i, j: (0, j)),
                    pl.BlockSpec((1, tn), lambda i, j: (0, j)),
                ],
                out_specs=pl.BlockSpec((tm, tn), lambda i, j: (i, j)),
            ),
            compiler_params=pltpu.CompilerParams(
                dimension_semantics=("parallel", "parallel"),
                vmem_limit_bytes=_VMEM_LIMIT),
        )
    else:
        call = pl.pallas_call(
            functools.partial(_matmul_kernel_acc, relu=relu),
            out_shape=jax.ShapeDtypeStruct((Mp, Np), out_dtype),
            grid_spec=pltpu.PrefetchScalarGridSpec(
                num_scalar_prefetch=0,
                grid=(Mp // tm, Np // tn, nk),
                in_specs=[
                    pl.BlockSpec((tm, tk), lambda i, j, k: (i, k)),
                    pl.BlockSpec((tk, tn), lambda i, j, k: (k, j)),
                    pl.BlockSpec((1, tn), lambda i, j, k: (0, j)),
                ],
                out_specs=pl.BlockSpec((tm, tn), lambda i, j, k: (i, j)),
                scratch_shapes=[pltpu.VMEM((tm, tn), jnp.float32)],
            ),
            compiler_params=pltpu.CompilerParams(
                dimension_semantics=("parallel", "parallel", "arbitrary"),
                vmem_limit_bytes=_VMEM_LIMIT),
        )
    return jax.jit(call)


@functools.lru_cache(maxsize=None)
def _dwconv_fn(N, Hp, Wp, C, KH, KW):
    OH = Hp - KH + 1
    OW = Wp - KW + 1
    call = pl.pallas_call(
        functools.partial(_dwconv_kernel, KH=KH, KW=KW, OH=OH, OW=OW),
        out_shape=jax.ShapeDtypeStruct((N, OH, OW, C), _ACT_DTYPE),
        grid=(N,),
        in_specs=[
            pl.BlockSpec((1, Hp, Wp, C), lambda n: (n, 0, 0, 0)),
            pl.BlockSpec((KH * KW, C), lambda n: (0, 0)),
            pl.BlockSpec((1, C), lambda n: (0, 0)),
        ],
        out_specs=pl.BlockSpec((1, OH, OW, C), lambda n: (n, 0, 0, 0)),
        compiler_params=pltpu.CompilerParams(
            dimension_semantics=("parallel",),
            vmem_limit_bytes=_VMEM_LIMIT),
    )
    return jax.jit(call)


@functools.lru_cache(maxsize=None)
def _combine_fn(nb, rows, width, relu, has_res):
    tr = _pick_tile(rows, (512, 256, 128))
    n_arr = nb + (1 if has_res else 0)
    in_specs = [pl.BlockSpec(memory_space=pltpu.MemorySpace.SMEM)]
    in_specs += [pl.BlockSpec((tr, width), lambda i: (i, 0)) for _ in range(n_arr)]
    call = pl.pallas_call(
        functools.partial(_combine_kernel, nb=nb, relu=relu, has_res=has_res),
        out_shape=jax.ShapeDtypeStruct((rows, width), _ACT_DTYPE),
        grid=(rows // tr,),
        in_specs=in_specs,
        out_specs=pl.BlockSpec((tr, width), lambda i: (i, 0)),
        compiler_params=pltpu.CompilerParams(
            dimension_semantics=("parallel",),
            vmem_limit_bytes=_VMEM_LIMIT),
    )
    return jax.jit(call)


@functools.lru_cache(maxsize=None)
def _avgpool_fn(N, HW, C):
    call = pl.pallas_call(
        _avgpool_kernel,
        out_shape=jax.ShapeDtypeStruct((N, C), jnp.float32),
        grid=(1,),
        in_specs=[pl.BlockSpec((N, HW, C), lambda i: (0, 0, 0))],
        out_specs=pl.BlockSpec((N, C), lambda i: (0, 0)),
        compiler_params=pltpu.CompilerParams(
            dimension_semantics=("arbitrary",),
            vmem_limit_bytes=_VMEM_LIMIT),
    )
    return jax.jit(call)


# ----------------------------------------------------------------------------
# Conv / matmul wrappers (glue: padding, bf16 im2col)
# ----------------------------------------------------------------------------

def matmul_bias_act(a, b, bias, relu=False, out_dtype=_ACT_DTYPE):
    """a: (M, K), b: (K, N), bias: (N,). bf16 MXU operands, f32 accumulate/epilogue."""
    M, K = a.shape
    _, N = b.shape
    Np = _round_up(N, 128)
    # Split K so the K tile stays <= _MAX_TK (one K step for nearly every layer).
    splits = max(1, -(-K // _MAX_TK))
    tk = _round_up(-(-K // splits), 128)
    Kp = tk * splits
    Mp = _round_up(M, 8)
    tm = _pick_tile(Mp, (512, 256, 128))
    tn = Np if Np <= 512 else _pick_tile(Np, (512, 256, 128))
    a_p = jnp.pad(a.astype(jnp.bfloat16), ((0, Mp - M), (0, Kp - K)))
    b_p = jnp.pad(b.astype(jnp.bfloat16), ((0, Kp - K), (0, Np - N)))
    bias_p = jnp.pad(bias.astype(jnp.float32), ((0, Np - N),)).reshape(1, Np)
    out = _matmul_fn(Mp, Kp, Np, tm, tk, tn, bool(relu), out_dtype)(a_p, b_p, bias_p)
    return out[:M, :N]


def conv2d_bn_act(x, w, b, stride=1, padding=0, relu=False):
    """x: NHWC, w: HWIO bf16 (BatchNorm already folded into w/b). Returns bf16 NHWC."""
    N, H, W, Cin = x.shape
    KH, KW, _, Cout = w.shape
    xb = x.astype(jnp.bfloat16)                       # bf16 patches -> half the HBM traffic
    if padding:
        xb = jnp.pad(xb, ((0, 0), (padding, padding), (padding, padding), (0, 0)))
    OH = (H + 2 * padding - KH) // stride + 1
    OW = (W + 2 * padding - KW) // stride + 1
    if KH == 1 and KW == 1:
        patches = xb[:, ::stride, ::stride, :].reshape(N * OH * OW, Cin)
    else:
        cols = [xb[:, kh:kh + stride * OH:stride, kw:kw + stride * OW:stride, :]
                for kh in range(KH) for kw in range(KW)]
        patches = jnp.concatenate(cols, axis=-1).reshape(N * OH * OW, KH * KW * Cin)
    out = matmul_bias_act(patches, w.reshape(KH * KW * Cin, Cout), b, relu=relu)
    return out.reshape(N, OH, OW, Cout)


def dwconv_bn_relu(x, w, b, stride=1, padding=1):
    """True depthwise conv. x: NHWC, w: (KH, KW, C) (BN folded), b: (C,).
    The Pallas kernel computes the stride-1 output over the padded input; stride-2
    outputs are obtained by subsampling (exact, and this branch is cheap)."""
    N, H, W, C = x.shape
    KH, KW, _ = w.shape
    xp = jnp.pad(x.astype(jnp.bfloat16),
                 ((0, 0), (padding, padding), (padding, padding), (0, 0)))
    Hp, Wp = H + 2 * padding, W + 2 * padding
    out = _dwconv_fn(N, Hp, Wp, C, KH, KW)(xp, w.reshape(KH * KW, C), b.reshape(1, C))
    if stride > 1:
        out = out[:, ::stride, ::stride, :]
    return out


# ----------------------------------------------------------------------------
# PITSuperNetModule / BasicBlock / network forward
# ----------------------------------------------------------------------------

def supernet_apply(x, p, stride, relu_out, residual=None):
    outs = []
    w, b = p['b0']
    outs.append(conv2d_bn_act(x, w, b, stride=stride, padding=1))       # 3x3 + BN
    w, b = p['b1']
    outs.append(conv2d_bn_act(x, w, b, stride=stride, padding=2))       # 5x5 + BN
    wd, bd = p['b2_dw']
    h = dwconv_bn_relu(x, wd, bd, stride=stride, padding=1)             # DW 3x3 + BN + ReLU
    w, b = p['b2_pw']
    outs.append(conv2d_bn_act(h, w, b, stride=1, padding=0))            # 1x1 + BN

    nb = p['alpha'].shape[0]
    if nb == 4:                                                         # Identity branch
        outs.append(x.astype(_ACT_DTYPE))

    N, OH, OW, Cout = outs[0].shape
    total = N * OH * OW * Cout
    width = 512 if total % 512 == 0 else Cout                           # lane-dense combine
    rows = total // width

    weights = jax.nn.softmax(p['alpha'].astype(jnp.float32))
    args = [weights] + [o.reshape(rows, width) for o in outs]
    has_res = residual is not None
    if has_res:
        args.append(residual.astype(_ACT_DTYPE).reshape(rows, width))
    out = _combine_fn(nb, rows, width, bool(relu_out), has_res)(*args)
    return out.reshape(N, OH, OW, Cout)


def basic_block_apply(x, p, stride):
    out = supernet_apply(x, p['conv1'], stride, relu_out=True)          # F.relu(conv1(x))
    if p['ds'] is not None:
        w, b = p['ds']
        residual = conv2d_bn_act(x, w, b, stride=stride, padding=0)     # downsample + bn_ds
    else:
        residual = x
    # conv2(out) + residual, ReLU — residual add + ReLU fused into the combine kernel.
    return supernet_apply(out, p['conv2'], 1, relu_out=True, residual=residual)


BLOCK_CFG = [('bb_1_0', 64, 64, 1), ('bb_1_1', 64, 64, 1),
             ('bb_2_0', 64, 128, 2), ('bb_2_1', 128, 128, 1),
             ('bb_3_0', 128, 256, 2), ('bb_3_1', 256, 256, 1),
             ('bb_4_0', 256, 512, 2), ('bb_4_1', 512, 512, 1)]


def resnet18_pitsn_forward(x, params):
    # stem: conv1 (3x3, s1, p1, no bias) + bn1 + relu  (std_head=False)
    w, b = params['stem']
    x = conv2d_bn_act(x, w, b, stride=1, padding=1, relu=True)
    for name, _cin, _cout, stride in BLOCK_CFG:
        x = basic_block_apply(x, params[name], stride)
    N, H, W, C = x.shape                                      # (N, 8, 8, 512)
    feat = _avgpool_fn(N, H * W, C)(x.reshape(N, H * W, C))   # AvgPool2d((8,8)) -> (N, 512) f32
    num_classes = params['fc_b'].shape[0]
    logits = matmul_bias_act(feat, params['fc_w'], params['fc_b'],
                             relu=False, out_dtype=jnp.float32)
    return logits[:, :num_classes]


# ----------------------------------------------------------------------------
# Deterministic parameter initialization (BN folded at setup time; conv weights in bf16)
# ----------------------------------------------------------------------------

_BN_EPS = 1e-5


def _fold_bn(w, b, cout):
    gamma = jnp.ones((cout,), jnp.float32)
    beta = jnp.zeros((cout,), jnp.float32)
    mean = jnp.zeros((cout,), jnp.float32)
    var = jnp.ones((cout,), jnp.float32)
    scale = gamma / jnp.sqrt(var + _BN_EPS)
    return w * scale, (b - mean) * scale + beta


def init_convbn(key, kh, kw, cin, cout, conv_bias=True):
    kw_k, kb_k = jax.random.split(key)
    std = (2.0 / (cout * kh * kw)) ** 0.5                  # kaiming_normal_, fan_out, relu
    w = jax.random.normal(kw_k, (kh, kw, cin, cout), jnp.float32) * std
    if conv_bias:
        bound = 1.0 / (cin * kh * kw) ** 0.5
        b = jax.random.uniform(kb_k, (cout,), jnp.float32, -bound, bound)
    else:
        b = jnp.zeros((cout,), jnp.float32)
    w, b = _fold_bn(w, b, cout)
    return w.astype(jnp.bfloat16), b                       # bf16 MXU weights, f32 bias


def init_dwconvbn(key, kh, kw, c):
    kw_k, kb_k = jax.random.split(key)
    std = (2.0 / (c * kh * kw)) ** 0.5
    w = jax.random.normal(kw_k, (kh, kw, c), jnp.float32) * std   # true depthwise (KH, KW, C)
    bound = 1.0 / (kh * kw) ** 0.5
    b = jax.random.uniform(kb_k, (c,), jnp.float32, -bound, bound)
    return _fold_bn(w, b, c)                               # f32 (used on the VPU)


def init_supernet(key, cin, cout):
    k0, k1, k2, k3 = jax.random.split(key, 4)
    nb = 4 if cin == cout else 3                           # identity branch iff cin == cout
    return {
        'b0': init_convbn(k0, 3, 3, cin, cout),
        'b1': init_convbn(k1, 5, 5, cin, cout),
        'b2_dw': init_dwconvbn(k2, 3, 3, cin),
        'b2_pw': init_convbn(k3, 1, 1, cin, cout),
        'alpha': jnp.zeros((nb,), jnp.float32),            # NAS arch params -> uniform softmax
    }


def init_block(key, cin, cout, stride):
    k1, k2, k3 = jax.random.split(key, 3)
    p = {
        'conv1': init_supernet(k1, cin, cout),
        'conv2': init_supernet(k2, cout, cout),
    }
    if stride != 1 or cin != cout:
        p['ds'] = init_convbn(k3, 1, 1, cin, cout, conv_bias=False)
    else:
        p['ds'] = None
    return p


def init_model(key, num_classes=200):
    keys = jax.random.split(key, 2 + len(BLOCK_CFG))
    params = {'stem': init_convbn(keys[0], 3, 3, 3, 64, conv_bias=False)}
    for i, (name, cin, cout, stride) in enumerate(BLOCK_CFG):
        params[name] = init_block(keys[1 + i], cin, cout, stride)
    fck_w, fck_b = jax.random.split(keys[-1])
    bound = 1.0 / (512 ** 0.5)
    params['fc_w'] = jax.random.uniform(fck_w, (512, num_classes), jnp.float32, -bound, bound)
    params['fc_b'] = jax.random.uniform(fck_b, (num_classes,), jnp.float32, -bound, bound)
    return params


# ----------------------------------------------------------------------------

if __name__ == "__main__":
    key = jax.random.PRNGKey(0)
    pkey, xkey = jax.random.split(key)

    params = init_model(pkey, num_classes=200)

    # Equivalent torch input: NCHW (2, 3, 64, 64); kernel layout is NHWC.
    # input_size=64 is required by the fixed AvgPool2d(kernel_size=(8, 8)) head (std_head=False).
    x = jax.random.normal(xkey, (2, 64, 64, 3), jnp.float32)

    fwd = jax.jit(resnet18_pitsn_forward)   # whole-graph jit: im2col/pad/cast glue fuses in XLA
    logits = fwd(x, params)
    logits = jax.block_until_ready(logits)

    assert logits.shape == (2, 200), logits.shape
    assert bool(jnp.all(jnp.isfinite(logits))), "non-finite logits"
    print("KERNEL_OK")
</pallas_src>

<mosaic_0001>
module attributes {stable_mosaic.version = 11 : i64} {
  func.func @_matmul_kernel_single(%arg0: i32, %arg1: i32, %arg2: memref<512x128xbf16, #tpu.memory_space<vmem>>, %arg3: memref<128x128xbf16, #tpu.memory_space<vmem>>, %arg4: memref<1x128xf32, #tpu.memory_space<vmem>>, %arg5: memref<512x128xbf16, #tpu.memory_space<vmem>>) attributes {dimension_semantics = [#tpu.dimension_semantics<parallel>, #tpu.dimension_semantics<parallel>], iteration_bounds = array<i64: 16, 1>, scalar_prefetch = 0 : i64, scratch_operands = 0 : i64, tpu.core_type = #tpu.core_type<tc>, window_params = [{transform_indices = @transform_0, window_bounds = array<i64: 512, 128>}, {transform_indices = @transform_1, window_bounds = array<i64: 128, 128>}, {transform_indices = @transform_2, window_bounds = array<i64: 1, 128>}, {transform_indices = @transform_3, window_bounds = array<i64: 512, 128>}]} {
    %c0 = arith.constant 0 : index
    %c0_0 = arith.constant 0 : index
    %0 = vector.load %arg2[%c0, %c0_0] : memref<512x128xbf16, #tpu.memory_space<vmem>>, vector<512x128xbf16>
    %c0_1 = arith.constant 0 : index
    %c0_2 = arith.constant 0 : index
    %1 = vector.load %arg3[%c0_1, %c0_2] : memref<128x128xbf16, #tpu.memory_space<vmem>>, vector<128x128xbf16>
    %cst = arith.constant dense<0.000000e+00> : vector<512x128xf32>
    %2 = tpu.matmul %0, %1, %cst {dimension_numbers = #tpu.dot_dimension_numbers<[1], [0], [0], [1], [0, 0, 1, 1], [], []>} : vector<512x128xbf16>, vector<128x128xbf16>, vector<512x128xf32> -> vector<512x128xf32>
    %c0_3 = arith.constant 0 : index
    %c0_4 = arith.constant 0 : index
    %3 = vector.load %arg4[%c0_3, %c0_4] : memref<1x128xf32, #tpu.memory_space<vmem>>, vector<1x128xf32>
    %4 = vector.broadcast %3 : vector<1x128xf32> to vector<512x128xf32>
    %5 = arith.addf %2, %4 : vector<512x128xf32>
    %cst_5 = arith.constant 0.000000e+00 : f32
    %6 = vector.broadcast %cst_5 : f32 to vector<512x128xf32>
    %7 = arith.maximumf %5, %6 : vector<512x128xf32>
    %8 = arith.truncf %7 : vector<512x128xf32> to vector<512x128xbf16>
    %c0_6 = arith.constant 0 : index
    %c0_7 = arith.constant 0 : index
    %9 = vector.load %arg5[%c0_6, %c0_7] : memref<512x128xbf16, #tpu.memory_space<vmem>>, vector<512x128xbf16>
    tpu.vector_store %arg5[%c0_6, %c0_7], %8 {strides = array<i32>} : memref<512x128xbf16, #tpu.memory_space<vmem>>, vector<512x128xbf16>,
    return
  }
  func.func @transform_0(%arg0: i32, %arg1: i32) -> (i32, i32) {
    %c0_i32 = arith.constant 0 : i32
    %c0_i32_0 = arith.constant 0 : i32
    return %arg0, %c0_i32 : i32, i32
  }
  func.func @transform_1(%arg0: i32, %arg1: i32) -> (i32, i32) {
    %c0_i32 = arith.constant 0 : i32
    %c0_i32_0 = arith.constant 0 : i32
    return %c0_i32, %arg1 : i32, i32
  }
  func.func @transform_2(%arg0: i32, %arg1: i32) -> (i32, i32) {
    %c0_i32 = arith.constant 0 : i32
    %c0_i32_0 = arith.constant 0 : i32
    return %c0_i32, %arg1 : i32, i32
  }
  func.func @transform_3(%arg0: i32, %arg1: i32) -> (i32, i32) {
    %c0_i32 = arith.constant 0 : i32
    return %arg0, %arg1 : i32, i32
  }
}

</mosaic_0001>

<llo_original>
// kernel: tpu_custom_call.1
$region0: #{tpu_custom_call.1}
  #allocation0 [shape = 'u32[]', space=smem, size = 0x4, offset = 0x4, fixed_abs, tag = 'smem constant byte address 0x4 - core index']
  #allocation1 [shape = 'u32[144,128]{1,0:T(1,128)}', space=vmem, size = 0x12000, scoped, tag = 'internal scratch']
  %s0 = inlined_call_operand.hbm [shape: bf16[8192,128], index: 0, kind: input, shape index: {}]
  %s1 = inlined_call_operand.hbm [shape: bf16[128,128], index: 1, kind: input, shape index: {}]
  %s2 = inlined_call_operand.hbm [shape: f32[1,128], index: 2, kind: input, shape index: {}]
  %s3 = inlined_call_operand.hbm [shape: bf16[8192,128], index: 3, kind: output, shape index: {}]
  %s4 = sld [smem:[#allocation0]]
  $region57: #{tpu_custom_call.1} parent=0
    _
  %s6 = ssub.s32 1, %s4
  %s7 = scalar_select 0, %s6, %s4
  $region1: #{tpu_custom_call.1} parent=0
    #allocation2 [shape = 'u8[262144]{0}', space=vmem, size = 0x40000, scoped, tag = 'input window, operand 0']
    #allocation3 [shape = 's32[2]{0}', space=sflag, size = 0x8, scoped, tag = 'scoped memory for tpu_custom_call.1']
    #allocation4 [shape = 's32[2]{0}', space=sflag, size = 0x8, scoped, tag = 'scoped memory for tpu_custom_call.1']
    #allocation5 [shape = 'u8[32768]{0}', space=vmem, size = 0x8000, scoped, tag = 'input window, operand 1, single buffered']
    #allocation6 [shape = 's32[1]{0}', space=sflag, size = 0x4, scoped, tag = 'scoped memory for tpu_custom_call.1']
    #allocation7 [shape = 'u8[512]{0}', space=vmem, size = 0x400, scoped, tag = 'input window, operand 2, single buffered']
    #allocation8 [shape = 'u8[262144]{0}', space=vmem, size = 0x40000, scoped, tag = 'output window, operand 0']
    %8 = vsyncpa [#allocation3], 0
    %s9 = scalar_lea.sflag [#allocation3], 1
    %10 = vsyncpa %s9, 0
    %11 = vsyncpa [#allocation6], 0
    %12 = vsyncpa [#allocation4], 0
    %s13 = scalar_lea.sflag [#allocation4], 1
    %14 = vsyncpa %s13, 0
    loop: start=0, step=1, limit=18
    $region2: #{tpu_custom_call.1} parent=1 // loop_pre_header
      _
    $region3: #{tpu_custom_call.1} parent=1 // loop_header
      %s16 = sphi 0, %s20
      %p17 = scmp.ge.s32.totalorder %s16, 18
      %s23 = sphi 0, %s35
      %s24 = sphi 0, %s31
      %s25 = sphi 0, %s23
      %s26 = sphi 0, %s24
      %s27 = sphi 0, %s25
      %s28 = sphi 0, %s26
      %s38 = sphi 0, %s40
      %s41 = sphi 0, %s38
      %s42 = sphi 0, %s41
      %s58 = sphi 0, %s42
      %s64 = sphi 0, %s66
      %s67 = sphi 0, %s64
      %s68 = sphi 0, %s67
      %s84 = sphi 0, %s68
      %s90 = sphi 0, %s92
      %s93 = sphi 0, %s90
      %s94 = sphi 0, %s93
      %s110 = sphi 0, %s94
      %s118 = sphi 0, %s120
      %s121 = sphi 0, %s118
      %s122 = sphi 0, %s121
      %s138 = sphi 0, %s122
    $region4: #{tpu_custom_call.1} parent=1 // loop_header_branch
      %19 = sbr.rel (%p17) target = $region8
    $region5: #{tpu_custom_call.1} parent=1 // loop_body
      %s21 = ssub.s32 %s16, 1
      %s22 = ssub.s32 %s16, 2
      %s29 = sadd.s32 1, %s24
      %p30 = scmp.ge.s32.totalorder %s29, 1
      %s31 = scalar_select %p30, 0, %s29
      %s32 = sadd.s32 1, %s23
      %s33 = scalar_select %p30, %s32, %s23
      %p34 = scmp.ge.s32.totalorder %s33, 16
      %s35 = scalar_select %p34, 0, %s33
      %s36 = ssub.s32 %s23, %s35
      %p37 = scmp.eq.s32.totalorder %s36, 0
      %s39 = sadd.s32 %s38, 1
      %s40 = scalar_select %p37, %s38, %s39
      %p43 = pneg %p37
      %p44 = scmp.eq.s32.totalorder %s16, 15
      %p45 = por %p43, %p44
      %p46 = scmp.ne.s32.totalorder %s38, %s41
      %p47 = scmp.eq.s32.totalorder %s16, 0
      %p48 = por %p46, %p47
      %p49 = scmp.ne.s32.totalorder %s38, %s41
      %p50 = scmp.eq.s32.totalorder %s21, 15
      %p51 = por %p49, %p50
      %p52 = scmp.ne.s32.totalorder %s41, %s42
      %p53 = scmp.eq.s32.totalorder %s21, 0
      %p54 = por %p52, %p53
      %p55 = scmp.ne.s32.totalorder %s41, %s42
      %p56 = scmp.eq.s32.totalorder %s22, 15
      %p57 = por %p55, %p56
      %p59 = scmp.ne.s32.totalorder %s42, %s58
      %p60 = scmp.eq.s32.totalorder %s22, 0
      %p61 = por %p59, %p60
      %s62 = ssub.s32 %s24, %s31
      %p63 = scmp.eq.s32.totalorder %s62, 0
      %s65 = sadd.s32 %s64, 1
      %s66 = scalar_select %p63, %s64, %s65
      %p69 = pneg %p63
      %p70 = scmp.eq.s32.totalorder %s16, 15
      %p71 = por %p69, %p70
      %p72 = scmp.ne.s32.totalorder %s64, %s67
      %p73 = scmp.eq.s32.totalorder %s16, 0
      %p74 = por %p72, %p73
      %p75 = scmp.ne.s32.totalorder %s64, %s67
      %p76 = scmp.eq.s32.totalorder %s21, 15
      %p77 = por %p75, %p76
      %p78 = scmp.ne.s32.totalorder %s67, %s68
      %p79 = scmp.eq.s32.totalorder %s21, 0
      %p80 = por %p78, %p79
      %p81 = scmp.ne.s32.totalorder %s67, %s68
      %p82 = scmp.eq.s32.totalorder %s22, 15
      %p83 = por %p81, %p82
      %p85 = scmp.ne.s32.totalorder %s68, %s84
      %p86 = scmp.eq.s32.totalorder %s22, 0
      %p87 = por %p85, %p86
      %s88 = ssub.s32 %s24, %s31
      %p89 = scmp.eq.s32.totalorder %s88, 0
      %s91 = sadd.s32 %s90, 1
      %s92 = scalar_select %p89, %s90, %s91
      %p95 = pneg %p89
      %p96 = scmp.eq.s32.totalorder %s16, 15
      %p97 = por %p95, %p96
      %p98 = scmp.ne.s32.totalorder %s90, %s93
      %p99 = scmp.eq.s32.totalorder %s16, 0
      %p100 = por %p98, %p99
      %p101 = scmp.ne.s32.totalorder %s90, %s93
      %p102 = scmp.eq.s32.totalorder %s21, 15
      %p103 = por %p101, %p102
      %p104 = scmp.ne.s32.totalorder %s93, %s94
      %p105 = scmp.eq.s32.totalorder %s21, 0
      %p106 = por %p104, %p105
      %p107 = scmp.ne.s32.totalorder %s93, %s94
      %p108 = scmp.eq.s32.totalorder %s22, 15
      %p109 = por %p107, %p108
      %p111 = scmp.ne.s32.totalorder %s94, %s110
      %p112 = scmp.eq.s32.totalorder %s22, 0
      %p113 = por %p111, %p112
      %s114 = ssub.s32 %s23, %s35
      %s115 = ssub.s32 %s24, %s31
      %s116 = sor.u32 %s114, %s115
      %p117 = scmp.eq.s32.totalorder %s116, 0
      %s119 = sadd.s32 %s118, 1
      %s120 = scalar_select %p117, %s118, %s119
      %p123 = pneg %p117
      %p124 = scmp.eq.s32.totalorder %s16, 15
      %p125 = por %p123, %p124
      %p126 = scmp.ne.s32.totalorder %s118, %s121
      %p127 = scmp.eq.s32.totalorder %s16, 0
      %p128 = por %p126, %p127
      %p129 = scmp.ne.s32.totalorder %s118, %s121
      %p130 = scmp.eq.s32.totalorder %s21, 15
      %p131 = por %p129, %p130
      %p132 = scmp.ne.s32.totalorder %s121, %s122
      %p133 = scmp.eq.s32.totalorder %s21, 0
      %p134 = por %p132, %p133
      %p135 = scmp.ne.s32.totalorder %s121, %s122
      %p136 = scmp.eq.s32.totalorder %s22, 15
      %p137 = por %p135, %p136
      %p139 = scmp.ne.s32.totalorder %s122, %s138
      %p140 = scmp.eq.s32.totalorder %s22, 0
      %p141 = por %p139, %p140
      %p142 = scmp.le.s32.totalorder 1, %s16
      %p143 = scmp.lt.s32.totalorder %s16, 17
      %p144 = pnand %p142, %p143
      %p145 = pneg %p144
      // Predicated region
      $region9: #{tpu_custom_call.1} parent=5 // pred_check
        _
      $region10: #{tpu_custom_call.1} parent=5 // pred_check_branch
        %147 = sbr.rel (%p144) target = $region12
      $region11: #{tpu_custom_call.1} parent=5 // pred_region
        %s148 = ssub.s32 %s16, 1
        // Predicated region
        $region13: #{tpu_custom_call.1} parent=11 // pred_check
          %p149 = pneg %p80
        $region14: #{tpu_custom_call.1} parent=11 // pred_check_branch
          %151 = sbr.rel (%p149) target = $region16
        $region15: #{tpu_custom_call.1} parent=11 // pred_region
          %s153 = ssub.s32 1024, 1024
          %154 = vsyncadd [#allocation6], %s153
          %s155 = smul.addr %s26, 64
          %s156 = scalar_lea.hbm %s1, %s155
          %s157 = sshll.u32 [#allocation5], 4
          %s158 = int_to_ptr.vmem [resolvable:$true] %s157
          %163 = dma.hbm_to_vmem [thread:$0]  %s156, 1024, %s158, [#allocation6], 64, 64, 4
        $region16: #{tpu_custom_call.1} parent=11 // pred_fallthru
          _
        // Predicated region
        $region17: #{tpu_custom_call.1} parent=11 // pred_check
          %p164 = pneg %p106
        $region18: #{tpu_custom_call.1} parent=11 // pred_check_branch
          %166 = sbr.rel (%p164) target = $region20
        $region19: #{tpu_custom_call.1} parent=11 // pred_region
          %s168 = ssub.s32 16, 16
          %169 = vsyncadd [#allocation6], %s168
          %s170 = smul.addr %s26, 16
          %s171 = scalar_lea.hbm %s2, %s170
          %s173 = sshll.u32 [#allocation7], 4
          %s174 = int_to_ptr.vmem [resolvable:$true] %s173
          %176 = dma.hbm_to_vmem [thread:$0]  %s171, 16, %s174, [#allocation6]
        $region20: #{tpu_custom_call.1} parent=11 // pred_fallthru
          _
      $region12: #{tpu_custom_call.1} parent=5 // pred_fallthru
        _
      %p177 = scmp.lt.s32.totalorder %s16, 16
      // Predicated region
      $region21: #{tpu_custom_call.1} parent=5 // pred_check
        %p178 = pneg %p177
      $region22: #{tpu_custom_call.1} parent=5 // pred_check_branch
        %180 = sbr.rel (%p178) target = $region24
      $region23: #{tpu_custom_call.1} parent=5 // pred_region
        // Predicated region
        $region25: #{tpu_custom_call.1} parent=23 // pred_check
          %p181 = pneg %p48
        $region26: #{tpu_custom_call.1} parent=23 // pred_check_branch
          %183 = sbr.rel (%p181) target = $region28
        $region27: #{tpu_custom_call.1} parent=23 // pred_region
          %s184 = sand.u32 %s38, 1
          %s185 = scalar_lea.sflag [#allocation3], %s184
          %s186 = sand.u32 %s38, 1
          %s187 = smul.addr %s186, 256
          %s188 = scalar_lea.vmem [#allocation2], %s187
          %s189 = smul.u32 64, %s23
          %s191 = ssub.s32 4096, 4096
          %192 = vsyncadd %s185, %s191
          %s193 = smul.addr %s189, 64
          %s194 = scalar_lea.hbm %s0, %s193
          %s195 = sshll.u32 %s188, 4
          %s196 = int_to_ptr.vmem [resolvable:$true] %s195
          %201 = dma.hbm_to_vmem [thread:$0]  %s194, 4096, %s196, %s185, 64, 64, 4
        $region28: #{tpu_custom_call.1} parent=23 // pred_fallthru
          _
      $region24: #{tpu_custom_call.1} parent=5 // pred_fallthru
        _
      %p202 = scmp.le.s32.totalorder 1, %s16
      %p203 = scmp.lt.s32.totalorder %s16, 17
      %p204 = pnand %p202, %p203
      %p205 = pneg %p204
      // Predicated region
      $region29: #{tpu_custom_call.1} parent=5 // pred_check
        _
      $region30: #{tpu_custom_call.1} parent=5 // pred_check_branch
        %207 = sbr.rel (%p204) target = $region32
      $region31: #{tpu_custom_call.1} parent=5 // pred_region
        %s208 = ssub.s32 %s16, 1
        %s209 = sand.u32 %s41, 1
        %s210 = scalar_lea.sflag [#allocation3], %s209
        %s211 = sand.u32 %s41, 1
        %s212 = smul.addr %s211, 256
        %s213 = scalar_lea.vmem [#allocation2], %s212
        // Predicated region
        $region33: #{tpu_custom_call.1} parent=31 // pred_check
          %p214 = pneg %p54
        $region34: #{tpu_custom_call.1} parent=31 // pred_check_branch
          %216 = sbr.rel (%p214) target = $region36
        $region35: #{tpu_custom_call.1} parent=31 // pred_region
          %217 = dma.done %s210, 4096
        $region36: #{tpu_custom_call.1} parent=31 // pred_fallthru
          _
        // Predicated region
        $region37: #{tpu_custom_call.1} parent=31 // pred_check
          %p218 = pneg %p80
        $region38: #{tpu_custom_call.1} parent=31 // pred_check_branch
          %220 = sbr.rel (%p218) target = $region40
        $region39: #{tpu_custom_call.1} parent=31 // pred_region
          %221 = dma.done [#allocation6], 1024
        $region40: #{tpu_custom_call.1} parent=31 // pred_fallthru
          _
        // Predicated region
        $region41: #{tpu_custom_call.1} parent=31 // pred_check
          %p222 = pneg %p106
        $region42: #{tpu_custom_call.1} parent=31 // pred_check_branch
          %224 = sbr.rel (%p222) target = $region44
        $region43: #{tpu_custom_call.1} parent=31 // pred_region
          %225 = dma.done [#allocation6], 16
        $region44: #{tpu_custom_call.1} parent=31 // pred_fallthru
          _
        %s226 = sand.u32 %s41, 1
        %s227 = scalar_lea.sflag [#allocation3], %s226
        %s228 = sand.u32 %s41, 1
        %s229 = smul.addr %s228, 256
        %s230 = scalar_lea.vmem [#allocation2], %s229
        %p231 = pneg %p54
        %p232 = pneg %p51
        %p233 = pneg %p80
        %p234 = pneg %p77
        %p235 = pneg %p106
        %p236 = pneg %p103
        %p237 = pneg %p134
        %p238 = pneg %p131
        %s239 = sand.u32 %s121, 1
        %s240 = scalar_lea.sflag [#allocation4], %s239
        %s241 = sand.u32 %s121, 1
        %s242 = smul.addr %s241, 256
        %s243 = scalar_lea.vmem [#allocation8], %s242
        %s244 = smul.u32 64, %s25
        %s245 = smul.u32 64, %s25
        %v247 = vld [vmem:[%s213] sm:$0xf]
        %v248 = vld [vmem:[%s213 + $0x4] sm:$0xf]
        %v249 = vld [vmem:[%s213 + $0x8] sm:$0xf]
        %v250 = vld [vmem:[%s213 + $0xc] sm:$0xf]
        %v251 = vld [vmem:[%s213 + $0x10] sm:$0xf]
        %v252 = vld [vmem:[%s213 + $0x14] sm:$0xf]
        %v253 = vld [vmem:[%s213 + $0x18] sm:$0xf]
        %v254 = vld [vmem:[%s213 + $0x1c] sm:$0xf]
        %v255 = vld [vmem:[%s213 + $0x20] sm:$0xf]
        %v256 = vld [vmem:[%s213 + $0x24] sm:$0xf]
        %v257 = vld [vmem:[%s213 + $0x28] sm:$0xf]
        %v258 = vld [vmem:[%s213 + $0x2c] sm:$0xf]
        %v259 = vld [vmem:[%s213 + $0x30] sm:$0xf]
        %v260 = vld [vmem:[%s213 + $0x34] sm:$0xf]
        %v261 = vld [vmem:[%s213 + $0x38] sm:$0xf]
        %v262 = vld [vmem:[%s213 + $0x3c] sm:$0xf]
        %v263 = vld [vmem:[%s213 + $0x40] sm:$0xf]
        %v264 = vld [vmem:[%s213 + $0x44] sm:$0xf]
        %v265 = vld [vmem:[%s213 + $0x48] sm:$0xf]
        %v266 = vld [vmem:[%s213 + $0x4c] sm:$0xf]
        %v267 = vld [vmem:[%s213 + $0x50] sm:$0xf]
        %v268 = vld [vmem:[%s213 + $0x54] sm:$0xf]
        %v269 = vld [vmem:[%s213 + $0x58] sm:$0xf]
        %v270 = vld [vmem:[%s213 + $0x5c] sm:$0xf]
        %v271 = vld [vmem:[%s213 + $0x60] sm:$0xf]
        %v272 = vld [vmem:[%s213 + $0x64] sm:$0xf]
        %v273 = vld [vmem:[%s213 + $0x68] sm:$0xf]
        %v274 = vld [vmem:[%s213 + $0x6c] sm:$0xf]
        %v275 = vld [vmem:[%s213 + $0x70] sm:$0xf]
        %v276 = vld [vmem:[%s213 + $0x74] sm:$0xf]
        %v277 = vld [vmem:[%s213 + $0x78] sm:$0xf]
        %v278 = vld [vmem:[%s213 + $0x7c] sm:$0xf]
        %v279 = vld [vmem:[%s213 + $0x80] sm:$0xf]
        %v280 = vld [vmem:[%s213 + $0x84] sm:$0xf]
        %v281 = vld [vmem:[%s213 + $0x88] sm:$0xf]
        %v282 = vld [vmem:[%s213 + $0x8c] sm:$0xf]
        %v283 = vld [vmem:[%s213 + $0x90] sm:$0xf]
        %v284 = vld [vmem:[%s213 + $0x94] sm:$0xf]
        %v285 = vld [vmem:[%s213 + $0x98] sm:$0xf]
        %v286 = vld [vmem:[%s213 + $0x9c] sm:$0xf]
        %v287 = vld [vmem:[%s213 + $0xa0] sm:$0xf]
        %v288 = vld [vmem:[%s213 + $0xa4] sm:$0xf]
        %v289 = vld [vmem:[%s213 + $0xa8] sm:$0xf]
        %v290 = vld [vmem:[%s213 + $0xac] sm:$0xf]
        %v291 = vld [vmem:[%s213 + $0xb0] sm:$0xf]
        %v292 = vld [vmem:[%s213 + $0xb4] sm:$0xf]
        %v293 = vld [vmem:[%s213 + $0xb8] sm:$0xf]
        %v294 = vld [vmem:[%s213 + $0xbc] sm:$0xf]
        %v295 = vld [vmem:[%s213 + $0xc0] sm:$0xf]
        %v296 = vld [vmem:[%s213 + $0xc4] sm:$0xf]
        %v297 = vld [vmem:[%s213 + $0xc8] sm:$0xf]
        %v298 = vld [vmem:[%s213 + $0xcc] sm:$0xf]
        %v299 = vld [vmem:[%s213 + $0xd0] sm:$0xf]
        %v300 = vld [vmem:[%s213 + $0xd4] sm:$0xf]
        %v301 = vld [vmem:[%s213 + $0xd8] sm:$0xf]
        %v302 = vld [vmem:[%s213 + $0xdc] sm:$0xf]
        %v303 = vld [vmem:[%s213 + $0xe0] sm:$0xf]
        %v304 = vld [vmem:[%s213 + $0xe4] sm:$0xf]
        %v305 = vld [vmem:[%s213 + $0xe8] sm:$0xf]
        %v306 = vld [vmem:[%s213 + $0xec] sm:$0xf]
        %v307 = vld [vmem:[%s213 + $0xf0] sm:$0xf]
        %v308 = vld [vmem:[%s213 + $0xf4] sm:$0xf]
        %v309 = vld [vmem:[%s213 + $0xf8] sm:$0xf]
        %v310 = vld [vmem:[%s213 + $0xfc] sm:$0xf]
        %v311 = vld [vmem:[#allocation5] sm:$0xf]
        %v312 = vld [vmem:[#allocation5 + $0x4] sm:$0xf]
        %v313 = vld [vmem:[#allocation5 + $0x8] sm:$0xf]
        %v314 = vld [vmem:[#allocation5 + $0xc] sm:$0xf]
        %v315 = vld [vmem:[#allocation5 + $0x10] sm:$0xf]
        %v316 = vld [vmem:[#allocation5 + $0x14] sm:$0xf]
        %v317 = vld [vmem:[#allocation5 + $0x18] sm:$0xf]
        %v318 = vld [vmem:[#allocation5 + $0x1c] sm:$0xf]
        %v319 = vld [vmem:[#allocation5 + $0x20] sm:$0xf]
        %v320 = vld [vmem:[#allocation5 + $0x24] sm:$0xf]
        %v321 = vld [vmem:[#allocation5 + $0x28] sm:$0xf]
        %v322 = vld [vmem:[#allocation5 + $0x2c] sm:$0xf]
        %v323 = vld [vmem:[#allocation5 + $0x30] sm:$0xf]
        %v324 = vld [vmem:[#allocation5 + $0x34] sm:$0xf]
        %v325 = vld [vmem:[#allocation5 + $0x38] sm:$0xf]
        %v326 = vld [vmem:[#allocation5 + $0x3c] sm:$0xf]
        %v327 = vld [vmem:[#allocation7] sm:$0x1]
        %v329 = vlaneseq
        %v330 = vshrl.u32 %v329, 7
        %v331 = vsub.s32 0, %v330
        %v332 = vrot.slane %v327, %v331
        %v398 = vunpack.c.l.b16 %v247
        %v399 = vunpack.c.l.b16 %v248
        %v400 = vunpack.c.l.b16 %v249
        %v401 = vunpack.c.l.b16 %v250
        %v402 = vunpack.c.l.b16 %v251
        %v403 = vunpack.c.l.b16 %v252
        %v404 = vunpack.c.l.b16 %v253
        %v405 = vunpack.c.l.b16 %v254
        %v406 = vunpack.c.l.b16 %v255
        %v407 = vunpack.c.l.b16 %v256
        %v408 = vunpack.c.l.b16 %v257
        %v409 = vunpack.c.l.b16 %v258
        %v410 = vunpack.c.l.b16 %v259
        %v411 = vunpack.c.l.b16 %v260
        %v412 = vunpack.c.l.b16 %v261
        %v413 = vunpack.c.l.b16 %v262
        %v414 = vunpack.c.l.b16 %v263
        %v415 = vunpack.c.l.b16 %v264
        %v416 = vunpack.c.l.b16 %v265
        %v417 = vunpack.c.l.b16 %v266
        %v418 = vunpack.c.l.b16 %v267
        %v419 = vunpack.c.l.b16 %v268
        %v420 = vunpack.c.l.b16 %v269
        %v421 = vunpack.c.l.b16 %v270
        %v422 = vunpack.c.l.b16 %v271
        %v423 = vunpack.c.l.b16 %v272
        %v424 = vunpack.c.l.b16 %v273
        %v425 = vunpack.c.l.b16 %v274
        %v426 = vunpack.c.l.b16 %v275
        %v427 = vunpack.c.l.b16 %v276
        %v428 = vunpack.c.l.b16 %v277
        %v429 = vunpack.c.l.b16 %v278
        %v430 = vunpack.c.l.b16 %v279
        %v431 = vunpack.c.l.b16 %v280
        %v432 = vunpack.c.l.b16 %v281
        %v433 = vunpack.c.l.b16 %v282
        %v434 = vunpack.c.l.b16 %v283
        %v435 = vunpack.c.l.b16 %v284
        %v436 = vunpack.c.l.b16 %v285
        %v437 = vunpack.c.l.b16 %v286
        %v438 = vunpack.c.l.b16 %v287
        %v439 = vunpack.c.l.b16 %v288
        %v440 = vunpack.c.l.b16 %v289
        %v441 = vunpack.c.l.b16 %v290
        %v442 = vunpack.c.l.b16 %v291
        %v443 = vunpack.c.l.b16 %v292
        %v444 = vunpack.c.l.b16 %v293
        %v445 = vunpack.c.l.b16 %v294
        %v446 = vunpack.c.l.b16 %v295
        %v447 = vunpack.c.l.b16 %v296
        %v448 = vunpack.c.l.b16 %v297
        %v449 = vunpack.c.l.b16 %v298
        %v450 = vunpack.c.l.b16 %v299
        %v451 = vunpack.c.l.b16 %v300
        %v452 = vunpack.c.l.b16 %v301
        %v453 = vunpack.c.l.b16 %v302
        %v454 = vunpack.c.l.b16 %v303
        %v455 = vunpack.c.l.b16 %v304
        %v456 = vunpack.c.l.b16 %v305
        %v457 = vunpack.c.l.b16 %v306
        %v458 = vunpack.c.l.b16 %v307
        %v459 = vunpack.c.l.b16 %v308
        %v460 = vunpack.c.l.b16 %v309
        %v461 = vunpack.c.l.b16 %v310
        %v462 = vpack.c.b16 %v399, %v398
        %v463 = vpack.c.b16 %v401, %v400
        %v464 = vpack.c.b16 %v403, %v402
        %v465 = vpack.c.b16 %v405, %v404
        %v466 = vpack.c.b16 %v407, %v406
        %v467 = vpack.c.b16 %v409, %v408
        %v468 = vpack.c.b16 %v411, %v410
        %v469 = vpack.c.b16 %v413, %v412
        %v470 = vpack.c.b16 %v415, %v414
        %v471 = vpack.c.b16 %v417, %v416
        %v472 = vpack.c.b16 %v419, %v418
        %v473 = vpack.c.b16 %v421, %v420
        %v474 = vpack.c.b16 %v423, %v422
        %v475 = vpack.c.b16 %v425, %v424
        %v476 = vpack.c.b16 %v427, %v426
        %v477 = vpack.c.b16 %v429, %v428
        %v478 = vpack.c.b16 %v431, %v430
        %v479 = vpack.c.b16 %v433, %v432
        %v480 = vpack.c.b16 %v435, %v434
        %v481 = vpack.c.b16 %v437, %v436
        %v482 = vpack.c.b16 %v439, %v438
        %v483 = vpack.c.b16 %v441, %v440
        %v484 = vpack.c.b16 %v443, %v442
        %v485 = vpack.c.b16 %v445, %v444
        %v486 = vpack.c.b16 %v447, %v446
        %v487 = vpack.c.b16 %v449, %v448
        %v488 = vpack.c.b16 %v451, %v450
        %v489 = vpack.c.b16 %v453, %v452
        %v490 = vpack.c.b16 %v455, %v454
        %v491 = vpack.c.b16 %v457, %v456
        %v492 = vpack.c.b16 %v459, %v458
        %v493 = vpack.c.b16 %v461, %v460
        %v542 = vunpack.c.l.b16 %v311
        %v543 = vunpack.c.l.b16 %v312
        %v544 = vunpack.c.l.b16 %v313
        %v545 = vunpack.c.l.b16 %v314
        %v546 = vunpack.c.l.b16 %v315
        %v547 = vunpack.c.l.b16 %v316
        %v548 = vunpack.c.l.b16 %v317
        %v549 = vunpack.c.l.b16 %v318
        %v550 = vunpack.c.l.b16 %v319
        %v551 = vunpack.c.l.b16 %v320
        %v552 = vunpack.c.l.b16 %v321
        %v553 = vunpack.c.l.b16 %v322
        %v554 = vunpack.c.l.b16 %v323
        %v555 = vunpack.c.l.b16 %v324
        %v556 = vunpack.c.l.b16 %v325
        %v557 = vunpack.c.l.b16 %v326
        %v558 = vpack.c.b16 %v543, %v542
        %v559 = vpack.c.b16 %v545, %v544
        %v560 = vpack.c.b16 %v547, %v546
        %v561 = vpack.c.b16 %v549, %v548
        %v562 = vpack.c.b16 %v551, %v550
        %v563 = vpack.c.b16 %v553, %v552
        %v564 = vpack.c.b16 %v555, %v554
        %v565 = vpack.c.b16 %v557, %v556
        %574 = vmatprep.subr.bf16.mxu0 0
        %575 = vmatpush1.bf16.msra.mxu0 %v558
        %576 = vmatprep.subr.bf16.mxu0 0
        %577 = vmatpush1.bf16.msra.mxu0 %v559
        %578 = vmatprep.subr.bf16.mxu0 0
        %579 = vmatpush1.bf16.msra.mxu0 %v560
        %580 = vmatprep.subr.bf16.mxu0 0
        %581 = vmatpush1.bf16.msra.mxu0 %v561
        %582 = vmatprep.subr.bf16.mxu0 0
        %583 = vmatpush1.bf16.msra.mxu0 %v562
        %584 = vmatprep.subr.bf16.mxu0 0
        %585 = vmatpush1.bf16.msra.mxu0 %v563
        %586 = vmatprep.subr.bf16.mxu0 0
        %587 = vmatpush1.bf16.msra.mxu0 %v564
        %588 = vmatprep.subr.bf16.mxu0 0
        %589 = vmatpush1.bf16.msra.mxu0 %v565
        %590 = vmatprep.subr.bf16.mxu0 0
        %591 = vmatpush1.bf16.msra.mxu0 0
        %592 = vmatprep.subr.bf16.mxu0 0
        %593 = vmatpush1.bf16.msra.mxu0 0
        %594 = vmatprep.subr.bf16.mxu0 0
        %595 = vmatpush1.bf16.msra.mxu0 0
        %596 = vmatprep.subr.bf16.mxu0 0
        %597 = vmatpush1.bf16.msra.mxu0 0
        %598 = vmatprep.subr.bf16.mxu0 0
        %599 = vmatpush1.bf16.msra.mxu0 0
        %600 = vmatprep.subr.bf16.mxu0 0
        %601 = vmatpush1.bf16.msra.mxu0 0
        %602 = vmatprep.subr.bf16.mxu0 0
        %603 = vmatpush1.bf16.msra.mxu0 0
        %604 = vmatprep.subr.bf16.mxu0 0
        %605 = vmatpush1.bf16.msra.mxu0 0
        %606 = vmatprep.mubr.bf16.mxu0 0
        %607 = vmatmul.mubr.bf16.gmra.mrb[0].mxu0 %v462
        %v608 = vpop.f32.mrb[0].mxu0
        %v609 = vadd.f32 %v332, %v608
        %v610 = vpop.f32.mrb[0].mxu0
        %v611 = vpop.f32.mrb[0].mxu0
        %v612 = vadd.f32 %v332, %v611
        %v613 = vpop.f32.mrb[0].mxu0
        %614 = vmatprep.mubr.bf16.mxu0 0
        %615 = vmatmul.mubr.bf16.gmra.mrb[0].mxu0 %v463
        %v616 = vpop.f32.mrb[0].mxu0
        %v617 = vadd.f32 %v332, %v616
        %v618 = vpop.f32.mrb[0].mxu0
        %v619 = vpop.f32.mrb[0].mxu0
        %v620 = vadd.f32 %v332, %v619
        %v621 = vpop.f32.mrb[0].mxu0
        %622 = vmatprep.mubr.bf16.mxu0 0
        %623 = vmatmul.mubr.bf16.gmra.mrb[0].mxu0 %v464
        %v624 = vpop.f32.mrb[0].mxu0
        %v625 = vadd.f32 %v332, %v624
        %v626 = vpop.f32.mrb[0].mxu0
        %v627 = vpop.f32.mrb[0].mxu0
        %v628 = vadd.f32 %v332, %v627
        %v629 = vpop.f32.mrb[0].mxu0
        %630 = vmatprep.mubr.bf16.mxu0 0
        %631 = vmatmul.mubr.bf16.gmra.mrb[0].mxu0 %v465
        %v632 = vpop.f32.mrb[0].mxu0
        %v633 = vadd.f32 %v332, %v632
        %v634 = vpop.f32.mrb[0].mxu0
        %v635 = vpop.f32.mrb[0].mxu0
        %v636 = vadd.f32 %v332, %v635
        %v637 = vpop.f32.mrb[0].mxu0
        %638 = vmatprep.mubr.bf16.mxu0 0
        %639 = vmatmul.mubr.bf16.gmra.mrb[0].mxu0 %v466
        %v640 = vpop.f32.mrb[0].mxu0
        %v641 = vadd.f32 %v332, %v640
        %v642 = vpop.f32.mrb[0].mxu0
        %v643 = vpop.f32.mrb[0].mxu0
        %v644 = vadd.f32 %v332, %v643
        %v645 = vpop.f32.mrb[0].mxu0
        %646 = vmatprep.mubr.bf16.mxu0 0
        %647 = vmatmul.mubr.bf16.gmra.mrb[0].mxu0 %v467
        %v648 = vpop.f32.mrb[0].mxu0
        %v649 = vadd.f32 %v332, %v648
        %v650 = vpop.f32.mrb[0].mxu0
        %v651 = vpop.f32.mrb[0].mxu0
        %v652 = vadd.f32 %v332, %v651
        %v653 = vpop.f32.mrb[0].mxu0
        %654 = vmatprep.mubr.bf16.mxu0 0
        %655 = vmatmul.mubr.bf16.gmra.mrb[0].mxu0 %v468
        %v656 = vpop.f32.mrb[0].mxu0
        %v657 = vadd.f32 %v332, %v656
        %v658 = vpop.f32.mrb[0].mxu0
        %v659 = vpop.f32.mrb[0].mxu0
        %v660 = vadd.f32 %v332, %v659
        %v661 = vpop.f32.mrb[0].mxu0
        %662 = vmatprep.mubr.bf16.mxu0 0
        %663 = vmatmul.mubr.bf16.gmra.mrb[0].mxu0 %v469
        %v664 = vpop.f32.mrb[0].mxu0
        %v665 = vadd.f32 %v332, %v664
        %v666 = vpop.f32.mrb[0].mxu0
        %v667 = vpop.f32.mrb[0].mxu0
        %v668 = vadd.f32 %v332, %v667
        %v669 = vpop.f32.mrb[0].mxu0
        %670 = vmatprep.mubr.bf16.mxu0 0
        %671 = vmatmul.mubr.bf16.gmra.mrb[0].mxu0 %v470
        %v672 = vpop.f32.mrb[0].mxu0
        %v673 = vadd.f32 %v332, %v672
        %v674 = vpop.f32.mrb[0].mxu0
        %v675 = vpop.f32.mrb[0].mxu0
        %v676 = vadd.f32 %v332, %v675
        %v677 = vpop.f32.mrb[0].mxu0
        %678 = vmatprep.mubr.bf16.mxu0 0
        %679 = vmatmul.mubr.bf16.gmra.mrb[0].mxu0 %v471
        %v680 = vpop.f32.mrb[0].mxu0
        %v681 = vadd.f32 %v332, %v680
        %v682 = vpop.f32.mrb[0].mxu0
        %v683 = vpop.f32.mrb[0].mxu0
        %v684 = vadd.f32 %v332, %v683
        %v685 = vpop.f32.mrb[0].mxu0
        %686 = vmatprep.mubr.bf16.mxu0 0
        %687 = vmatmul.mubr.bf16.gmra.mrb[0].mxu0 %v472
        %v688 = vpop.f32.mrb[0].mxu0
        %v689 = vadd.f32 %v332, %v688
        %v690 = vpop.f32.mrb[0].mxu0
        %v691 = vpop.f32.mrb[0].mxu0
        %v692 = vadd.f32 %v332, %v691
        %v693 = vpop.f32.mrb[0].mxu0
        %694 = vmatprep.mubr.bf16.mxu0 0
        %695 = vmatmul.mubr.bf16.gmra.mrb[0].mxu0 %v473
        %v696 = vpop.f32.mrb[0].mxu0
        %v697 = vadd.f32 %v332, %v696
        %v698 = vpop.f32.mrb[0].mxu0
        %v699 = vpop.f32.mrb[0].mxu0
        %v700 = vadd.f32 %v332, %v699
        %v701 = vpop.f32.mrb[0].mxu0
        %702 = vmatprep.mubr.bf16.mxu0 0
        %703 = vmatmul.mubr.bf16.gmra.mrb[0].mxu0 %v474
        %v704 = vpop.f32.mrb[0].mxu0
        %v705 = vadd.f32 %v332, %v704
        %v706 = vpop.f32.mrb[0].mxu0
        %v707 = vpop.f32.mrb[0].mxu0
        %v708 = vadd.f32 %v332, %v707
        %v709 = vpop.f32.mrb[0].mxu0
        %710 = vmatprep.mubr.bf16.mxu0 0
        %711 = vmatmul.mubr.bf16.gmra.mrb[0].mxu0 %v475
        %v712 = vpop.f32.mrb[0].mxu0
        %v713 = vadd.f32 %v332, %v712
        %v714 = vpop.f32.mrb[0].mxu0
        %v715 = vpop.f32.mrb[0].mxu0
        %v716 = vadd.f32 %v332, %v715
        %v717 = vpop.f32.mrb[0].mxu0
        %718 = vmatprep.mubr.bf16.mxu0 0
        %719 = vmatmul.mubr.bf16.gmra.mrb[0].mxu0 %v476
        %v720 = vpop.f32.mrb[0].mxu0
        %v721 = vadd.f32 %v332, %v720
        %v722 = vpop.f32.mrb[0].mxu0
        %v723 = vpop.f32.mrb[0].mxu0
        %v724 = vadd.f32 %v332, %v723
        %v725 = vpop.f32.mrb[0].mxu0
        %726 = vmatprep.mubr.bf16.mxu0 0
        %727 = vmatmul.mubr.bf16.gmra.mrb[0].mxu0 %v477
        %v728 = vpop.f32.mrb[0].mxu0
        %v729 = vadd.f32 %v332, %v728
        %v730 = vpop.f32.mrb[0].mxu0
        %v731 = vpop.f32.mrb[0].mxu0
        %v732 = vadd.f32 %v332, %v731
        %v733 = vpop.f32.mrb[0].mxu0
        %734 = vmatprep.mubr.bf16.mxu0 0
        %735 = vmatmul.mubr.bf16.gmra.mrb[0].mxu0 %v478
        %v736 = vpop.f32.mrb[0].mxu0
        %v737 = vadd.f32 %v332, %v736
        %v738 = vpop.f32.mrb[0].mxu0
        %v739 = vpop.f32.mrb[0].mxu0
        %v740 = vadd.f32 %v332, %v739
        %v741 = vpop.f32.mrb[0].mxu0
        %742 = vmatprep.mubr.bf16.mxu0 0
        %743 = vmatmul.mubr.bf16.gmra.mrb[0].mxu0 %v479
        %v744 = vpop.f32.mrb[0].mxu0
        %v745 = vadd.f32 %v332, %v744
        %v746 = vpop.f32.mrb[0].mxu0
        %v747 = vpop.f32.mrb[0].mxu0
        %v748 = vadd.f32 %v332, %v747
        %v749 = vpop.f32.mrb[0].mxu0
        %750 = vmatprep.mubr.bf16.mxu0 0
        %751 = vmatmul.mubr.bf16.gmra.mrb[0].mxu0 %v480
        %v752 = vpop.f32.mrb[0].mxu0
        %v753 = vadd.f32 %v332, %v752
        %v754 = vpop.f32.mrb[0].mxu0
        %v755 = vpop.f32.mrb[0].mxu0
        %v756 = vadd.f32 %v332, %v755
        %v757 = vpop.f32.mrb[0].mxu0
        %758 = vmatprep.mubr.bf16.mxu0 0
        %759 = vmatmul.mubr.bf16.gmra.mrb[0].mxu0 %v481
        %v760 = vpop.f32.mrb[0].mxu0
        %v761 = vadd.f32 %v332, %v760
        %v762 = vpop.f32.mrb[0].mxu0
        %v763 = vpop.f32.mrb[0].mxu0
        %v764 = vadd.f32 %v332, %v763
        %v765 = vpop.f32.mrb[0].mxu0
        %766 = vmatprep.mubr.bf16.mxu0 0
        %767 = vmatmul.mubr.bf16.gmra.mrb[0].mxu0 %v482
        %v768 = vpop.f32.mrb[0].mxu0
        %v769 = vadd.f32 %v332, %v768
        %v770 = vpop.f32.mrb[0].mxu0
        %v771 = vpop.f32.mrb[0].mxu0
        %v772 = vadd.f32 %v332, %v771
        %v773 = vpop.f32.mrb[0].mxu0
        %774 = vmatprep.mubr.bf16.mxu0 0
        %775 = vmatmul.mubr.bf16.gmra.mrb[0].mxu0 %v483
        %v776 = vpop.f32.mrb[0].mxu0
        %v777 = vadd.f32 %v332, %v776
        %v778 = vpop.f32.mrb[0].mxu0
        %v779 = vpop.f32.mrb[0].mxu0
        %v780 = vadd.f32 %v332, %v779
        %v781 = vpop.f32.mrb[0].mxu0
        %782 = vmatprep.mubr.bf16.mxu0 0
        %783 = vmatmul.mubr.bf16.gmra.mrb[0].mxu0 %v484
        %v784 = vpop.f32.mrb[0].mxu0
        %v785 = vadd.f32 %v332, %v784
        %v786 = vpop.f32.mrb[0].mxu0
        %v787 = vpop.f32.mrb[0].mxu0
        %v788 = vadd.f32 %v332, %v787
        %v789 = vpop.f32.mrb[0].mxu0
        %790 = vmatprep.mubr.bf16.mxu0 0
        %791 = vmatmul.mubr.bf16.gmra.mrb[0].mxu0 %v485
        %v792 = vpop.f32.mrb[0].mxu0
        %v793 = vadd.f32 %v332, %v792
        %v794 = vpop.f32.mrb[0].mxu0
        %v795 = vpop.f32.mrb[0].mxu0
        %v796 = vadd.f32 %v332, %v795
        %v797 = vpop.f32.mrb[0].mxu0
        %798 = vmatprep.mubr.bf16.mxu0 0
        %799 = vmatmul.mubr.bf16.gmra.mrb[0].mxu0 %v486
        %v800 = vpop.f32.mrb[0].mxu0
        %v801 = vadd.f32 %v332, %v800
        %v802 = vpop.f32.mrb[0].mxu0
        %v803 = vpop.f32.mrb[0].mxu0
        %v804 = vadd.f32 %v332, %v803
        %v805 = vpop.f32.mrb[0].mxu0
        %806 = vmatprep.mubr.bf16.mxu0 0
        %807 = vmatmul.mubr.bf16.gmra.mrb[0].mxu0 %v487
        %v808 = vpop.f32.mrb[0].mxu0
        %v809 = vadd.f32 %v332, %v808
        %v810 = vpop.f32.mrb[0].mxu0
        %v811 = vpop.f32.mrb[0].mxu0
        %v812 = vadd.f32 %v332, %v811
        %v813 = vpop.f32.mrb[0].mxu0
        %814 = vmatprep.mubr.bf16.mxu0 0
        %815 = vmatmul.mubr.bf16.gmra.mrb[0].mxu0 %v488
        %v816 = vpop.f32.mrb[0].mxu0
        %v817 = vadd.f32 %v332, %v816
        %v818 = vpop.f32.mrb[0].mxu0
        %v819 = vpop.f32.mrb[0].mxu0
        %v820 = vadd.f32 %v332, %v819
        %v821 = vpop.f32.mrb[0].mxu0
        %822 = vmatprep.mubr.bf16.mxu0 0
        %823 = vmatmul.mubr.bf16.gmra.mrb[0].mxu0 %v489
        %v824 = vpop.f32.mrb[0].mxu0
        %v825 = vadd.f32 %v332, %v824
        %v826 = vpop.f32.mrb[0].mxu0
        %v827 = vpop.f32.mrb[0].mxu0
        %v828 = vadd.f32 %v332, %v827
        %v829 = vpop.f32.mrb[0].mxu0
        %830 = vmatprep.mubr.bf16.mxu0 0
        %831 = vmatmul.mubr.bf16.gmra.mrb[0].mxu0 %v490
        %v832 = vpop.f32.mrb[0].mxu0
        %v833 = vadd.f32 %v332, %v832
        %v834 = vpop.f32.mrb[0].mxu0
        %v835 = vpop.f32.mrb[0].mxu0
        %v836 = vadd.f32 %v332, %v835
        %v837 = vpop.f32.mrb[0].mxu0
        %838 = vmatprep.mubr.bf16.mxu0 0
        %839 = vmatmul.mubr.bf16.gmra.mrb[0].mxu0 %v491
        %v840 = vpop.f32.mrb[0].mxu0
        %v841 = vadd.f32 %v332, %v840
        %v842 = vpop.f32.mrb[0].mxu0
        %v843 = vpop.f32.mrb[0].mxu0
        %v844 = vadd.f32 %v332, %v843
        %v845 = vpop.f32.mrb[0].mxu0
        %846 = vmatprep.mubr.bf16.mxu0 0
        %847 = vmatmul.mubr.bf16.gmra.mrb[0].mxu0 %v492
        %v848 = vpop.f32.mrb[0].mxu0
        %v849 = vadd.f32 %v332, %v848
        %v850 = vpop.f32.mrb[0].mxu0
        %v851 = vpop.f32.mrb[0].mxu0
        %v852 = vadd.f32 %v332, %v851
        %v853 = vpop.f32.mrb[0].mxu0
        %854 = vmatprep.mubr.bf16.mxu0 0
        %855 = vmatmul.mubr.bf16.gmra.mrb[0].mxu0 %v493
        %v856 = vpop.f32.mrb[0].mxu0
        %v857 = vadd.f32 %v332, %v856
        %v858 = vpop.f32.mrb[0].mxu0
        %v859 = vpop.f32.mrb[0].mxu0
        %v860 = vadd.f32 %v332, %v859
        %v861 = vpop.f32.mrb[0].mxu0
        %862 = vdwg.mxu0
        %v863 = vmax.f32 %v609, 0.0
        %v864 = vmax.f32 %v612, 0.0
        %v865 = vmax.f32 %v617, 0.0
        %v866 = vmax.f32 %v620, 0.0
        %v867 = vmax.f32 %v625, 0.0
        %v868 = vmax.f32 %v628, 0.0
        %v869 = vmax.f32 %v633, 0.0
        %v870 = vmax.f32 %v636, 0.0
        %v871 = vmax.f32 %v641, 0.0
        %v872 = vmax.f32 %v644, 0.0
        %v873 = vmax.f32 %v649, 0.0
        %v874 = vmax.f32 %v652, 0.0
        %v875 = vmax.f32 %v657, 0.0
        %v876 = vmax.f32 %v660, 0.0
        %v877 = vmax.f32 %v665, 0.0
        %v878 = vmax.f32 %v668, 0.0
        %v879 = vmax.f32 %v673, 0.0
        %v880 = vmax.f32 %v676, 0.0
        %v881 = vmax.f32 %v681, 0.0
        %v882 = vmax.f32 %v684, 0.0
        %v883 = vmax.f32 %v689, 0.0
        %v884 = vmax.f32 %v692, 0.0
        %v885 = vmax.f32 %v697, 0.0
        %v886 = vmax.f32 %v700, 0.0
        %v887 = vmax.f32 %v705, 0.0
        %v888 = vmax.f32 %v708, 0.0
        %v889 = vmax.f32 %v713, 0.0
        %v890 = vmax.f32 %v716, 0.0
        %v891 = vmax.f32 %v721, 0.0
        %v892 = vmax.f32 %v724, 0.0
        %v893 = vmax.f32 %v729, 0.0
        %v894 = vmax.f32 %v732, 0.0
        %v895 = vmax.f32 %v737, 0.0
        %v896 = vmax.f32 %v740, 0.0
        %v897 = vmax.f32 %v745, 0.0
        %v898 = vmax.f32 %v748, 0.0
        %v899 = vmax.f32 %v753, 0.0
        %v900 = vmax.f32 %v756, 0.0
        %v901 = vmax.f32 %v761, 0.0
        %v902 = vmax.f32 %v764, 0.0
        %v903 = vmax.f32 %v769, 0.0
        %v904 = vmax.f32 %v772, 0.0
        %v905 = vmax.f32 %v777, 0.0
        %v906 = vmax.f32 %v780, 0.0
        %v907 = vmax.f32 %v785, 0.0
        %v908 = vmax.f32 %v788, 0.0
        %v909 = vmax.f32 %v793, 0.0
        %v910 = vmax.f32 %v796, 0.0
        %v911 = vmax.f32 %v801, 0.0
        %v912 = vmax.f32 %v804, 0.0
        %v913 = vmax.f32 %v809, 0.0
        %v914 = vmax.f32 %v812, 0.0
        %v915 = vmax.f32 %v817, 0.0
        %v916 = vmax.f32 %v820, 0.0
        %v917 = vmax.f32 %v825, 0.0
        %v918 = vmax.f32 %v828, 0.0
        %v919 = vmax.f32 %v833, 0.0
        %v920 = vmax.f32 %v836, 0.0
        %v921 = vmax.f32 %v841, 0.0
        %v922 = vmax.f32 %v844, 0.0
        %v923 = vmax.f32 %v849, 0.0
        %v924 = vmax.f32 %v852, 0.0
        %v925 = vmax.f32 %v857, 0.0
        %v926 = vmax.f32 %v860, 0.0
        %v927 = vpack.c.bf16 %v864, %v863
        %v928 = vpack.c.bf16 %v866, %v865
        %v929 = vpack.c.bf16 %v868, %v867
        %v930 = vpack.c.bf16 %v870, %v869
        %v931 = vpack.c.bf16 %v872, %v871
        %v932 = vpack.c.bf16 %v874, %v873
        %v933 = vpack.c.bf16 %v876, %v875
        %v934 = vpack.c.bf16 %v878, %v877
        %v935 = vpack.c.bf16 %v880, %v879
        %v936 = vpack.c.bf16 %v882, %v881
        %v937 = vpack.c.bf16 %v884, %v883
        %v938 = vpack.c.bf16 %v886, %v885
        %v939 = vpack.c.bf16 %v888, %v887
        %v940 = vpack.c.bf16 %v890, %v889
        %v941 = vpack.c.bf16 %v892, %v891
        %v942 = vpack.c.bf16 %v894, %v893
        %v943 = vpack.c.bf16 %v896, %v895
        %v944 = vpack.c.bf16 %v898, %v897
        %v945 = vpack.c.bf16 %v900, %v899
        %v946 = vpack.c.bf16 %v902, %v901
        %v947 = vpack.c.bf16 %v904, %v903
        %v948 = vpack.c.bf16 %v906, %v905
        %v949 = vpack.c.bf16 %v908, %v907
        %v950 = vpack.c.bf16 %v910, %v909
        %v951 = vpack.c.bf16 %v912, %v911
        %v952 = vpack.c.bf16 %v914, %v913
        %v953 = vpack.c.bf16 %v916, %v915
        %v954 = vpack.c.bf16 %v918, %v917
        %v955 = vpack.c.bf16 %v920, %v919
        %v956 = vpack.c.bf16 %v922, %v921
        %v957 = vpack.c.bf16 %v924, %v923
        %v958 = vpack.c.bf16 %v926, %v925
        %v991 = vunpack.c.l.b16 %v927
        %v992 = vunpack.c.h.b16 %v927
        %v993 = vunpack.c.l.b16 %v928
        %v994 = vunpack.c.h.b16 %v928
        %v995 = vunpack.c.l.b16 %v929
        %v996 = vunpack.c.h.b16 %v929
        %v997 = vunpack.c.l.b16 %v930
        %v998 = vunpack.c.h.b16 %v930
        %v999 = vunpack.c.l.b16 %v931
        %v1000 = vunpack.c.h.b16 %v931
        %v1001 = vunpack.c.l.b16 %v932
        %v1002 = vunpack.c.h.b16 %v932
        %v1003 = vunpack.c.l.b16 %v933
        %v1004 = vunpack.c.h.b16 %v933
        %v1005 = vunpack.c.l.b16 %v934
        %v1006 = vunpack.c.h.b16 %v934
        %v1007 = vunpack.c.l.b16 %v935
        %v1008 = vunpack.c.h.b16 %v935
        %v1009 = vunpack.c.l.b16 %v936
        %v1010 = vunpack.c.h.b16 %v936
        %v1011 = vunpack.c.l.b16 %v937
        %v1012 = vunpack.c.h.b16 %v937
        %v1013 = vunpack.c.l.b16 %v938
        %v1014 = vunpack.c.h.b16 %v938
        %v1015 = vunpack.c.l.b16 %v939
        %v1016 = vunpack.c.h.b16 %v939
        %v1017 = vunpack.c.l.b16 %v940
        %v1018 = vunpack.c.h.b16 %v940
        %v1019 = vunpack.c.l.b16 %v941
        %v1020 = vunpack.c.h.b16 %v941
        %v1021 = vunpack.c.l.b16 %v942
        %v1022 = vunpack.c.h.b16 %v942
        %v1023 = vunpack.c.l.b16 %v943
        %v1024 = vunpack.c.h.b16 %v943
        %v1025 = vunpack.c.l.b16 %v944
        %v1026 = vunpack.c.h.b16 %v944
        %v1027 = vunpack.c.l.b16 %v945
        %v1028 = vunpack.c.h.b16 %v945
        %v1029 = vunpack.c.l.b16 %v946
        %v1030 = vunpack.c.h.b16 %v946
        %v1031 = vunpack.c.l.b16 %v947
        %v1032 = vunpack.c.h.b16 %v947
        %v1033 = vunpack.c.l.b16 %v948
        %v1034 = vunpack.c.h.b16 %v948
        %v1035 = vunpack.c.l.b16 %v949
        %v1036 = vunpack.c.h.b16 %v949
        %v1037 = vunpack.c.l.b16 %v950
        %v1038 = vunpack.c.h.b16 %v950
        %v1039 = vunpack.c.l.b16 %v951
        %v1040 = vunpack.c.h.b16 %v951
        %v1041 = vunpack.c.l.b16 %v952
        %v1042 = vunpack.c.h.b16 %v952
        %v1043 = vunpack.c.l.b16 %v953
        %v1044 = vunpack.c.h.b16 %v953
        %v1045 = vunpack.c.l.b16 %v954
        %v1046 = vunpack.c.h.b16 %v954
        %v1047 = vunpack.c.l.b16 %v955
        %v1048 = vunpack.c.h.b16 %v955
        %v1049 = vunpack.c.l.b16 %v956
        %v1050 = vunpack.c.h.b16 %v956
        %v1051 = vunpack.c.l.b16 %v957
        %v1052 = vunpack.c.h.b16 %v957
        %v1053 = vunpack.c.l.b16 %v958
        %v1054 = vunpack.c.h.b16 %v958
        %v1055 = vpack.c.b16 %v991, %v991
        %v1056 = vpack.c.b16 %v992, %v992
        %v1057 = vpack.c.b16 %v993, %v993
        %v1058 = vpack.c.b16 %v994, %v994
        %v1059 = vpack.c.b16 %v995, %v995
        %v1060 = vpack.c.b16 %v996, %v996
        %v1061 = vpack.c.b16 %v997, %v997
        %v1062 = vpack.c.b16 %v998, %v998
        %v1063 = vpack.c.b16 %v999, %v999
        %v1064 = vpack.c.b16 %v1000, %v1000
        %v1065 = vpack.c.b16 %v1001, %v1001
        %v1066 = vpack.c.b16 %v1002, %v1002
        %v1067 = vpack.c.b16 %v1003, %v1003
        %v1068 = vpack.c.b16 %v1004, %v1004
        %v1069 = vpack.c.b16 %v1005, %v1005
        %v1070 = vpack.c.b16 %v1006, %v1006
        %v1071 = vpack.c.b16 %v1007, %v1007
        %v1072 = vpack.c.b16 %v1008, %v1008
        %v1073 = vpack.c.b16 %v1009, %v1009
        %v1074 = vpack.c.b16 %v1010, %v1010
        %v1075 = vpack.c.b16 %v1011, %v1011
        %v1076 = vpack.c.b16 %v1012, %v1012
        %v1077 = vpack.c.b16 %v1013, %v1013
        %v1078 = vpack.c.b16 %v1014, %v1014
        %v1079 = vpack.c.b16 %v1015, %v1015
        %v1080 = vpack.c.b16 %v1016, %v1016
        %v1081 = vpack.c.b16 %v1017, %v1017
        %v1082 = vpack.c.b16 %v1018, %v1018
        %v1083 = vpack.c.b16 %v1019, %v1019
        %v1084 = vpack.c.b16 %v1020, %v1020
        %v1085 = vpack.c.b16 %v1021, %v1021
        %v1086 = vpack.c.b16 %v1022, %v1022
        %v1087 = vpack.c.b16 %v1023, %v1023
        %v1088 = vpack.c.b16 %v1024, %v1024
        %v1089 = vpack.c.b16 %v1025, %v1025
        %v1090 = vpack.c.b16 %v1026, %v1026
        %v1091 = vpack.c.b16 %v1027, %v1027
        %v1092 = vpack.c.b16 %v1028, %v1028
        %v1093 = vpack.c.b16 %v1029, %v1029
        %v1094 = vpack.c.b16 %v1030, %v1030
        %v1095 = vpack.c.b16 %v1031, %v1031
        %v1096 = vpack.c.b16 %v1032, %v1032
        %v1097 = vpack.c.b16 %v1033, %v1033
        %v1098 = vpack.c.b16 %v1034, %v1034
        %v1099 = vpack.c.b16 %v1035, %v1035
        %v1100 = vpack.c.b16 %v1036, %v1036
        %v1101 = vpack.c.b16 %v1037, %v1037
        %v1102 = vpack.c.b16 %v1038, %v1038
        %v1103 = vpack.c.b16 %v1039, %v1039
        %v1104 = vpack.c.b16 %v1040, %v1040
        %v1105 = vpack.c.b16 %v1041, %v1041
        %v1106 = vpack.c.b16 %v1042, %v1042
        %v1107 = vpack.c.b16 %v1043, %v1043
        %v1108 = vpack.c.b16 %v1044, %v1044
        %v1109 = vpack.c.b16 %v1045, %v1045
        %v1110 = vpack.c.b16 %v1046, %v1046
        %v1111 = vpack.c.b16 %v1047, %v1047
        %v1112 = vpack.c.b16 %v1048, %v1048
        %v1113 = vpack.c.b16 %v1049, %v1049
        %v1114 = vpack.c.b16 %v1050, %v1050
        %v1115 = vpack.c.b16 %v1051, %v1051
        %v1116 = vpack.c.b16 %v1052, %v1052
        %v1117 = vpack.c.b16 %v1053, %v1053
        %v1118 = vpack.c.b16 %v1054, %v1054
        %1183 = vst [vmem:[%s243] sm:$0xf] %v1055
        %1184 = vst [vmem:[%s243 + $0x4] sm:$0xf] %v1056
        %1185 = vst [vmem:[%s243 + $0x8] sm:$0xf] %v1057
        %1186 = vst [vmem:[%s243 + $0xc] sm:$0xf] %v1058
        %1187 = vst [vmem:[%s243 + $0x10] sm:$0xf] %v1059
        %1188 = vst [vmem:[%s243 + $0x14] sm:$0xf] %v1060
        %1189 = vst [vmem:[%s243 + $0x18] sm:$0xf] %v1061
        %1190 = vst [vmem:[%s243 + $0x1c] sm:$0xf] %v1062
        %1191 = vst [vmem:[%s243 + $0x20] sm:$0xf] %v1063
        %1192 = vst [vmem:[%s243 + $0x24] sm:$0xf] %v1064
        %1193 = vst [vmem:[%s243 + $0x28] sm:$0xf] %v1065
        %1194 = vst [vmem:[%s243 + $0x2c] sm:$0xf] %v1066
        %1195 = vst [vmem:[%s243 + $0x30] sm:$0xf] %v1067
        %1196 = vst [vmem:[%s243 + $0x34] sm:$0xf] %v1068
        %1197 = vst [vmem:[%s243 + $0x38] sm:$0xf] %v1069
        %1198 = vst [vmem:[%s243 + $0x3c] sm:$0xf] %v1070
        %1199 = vst [vmem:[%s243 + $0x40] sm:$0xf] %v1071
        %1200 = vst [vmem:[%s243 + $0x44] sm:$0xf] %v1072
        %1201 = vst [vmem:[%s243 + $0x48] sm:$0xf] %v1073
        %1202 = vst [vmem:[%s243 + $0x4c] sm:$0xf] %v1074
        %1203 = vst [vmem:[%s243 + $0x50] sm:$0xf] %v1075
        %1204 = vst [vmem:[%s243 + $0x54] sm:$0xf] %v1076
        %1205 = vst [vmem:[%s243 + $0x58] sm:$0xf] %v1077
        %1206 = vst [vmem:[%s243 + $0x5c] sm:$0xf] %v1078
        %1207 = vst [vmem:[%s243 + $0x60] sm:$0xf] %v1079
        %1208 = vst [vmem:[%s243 + $0x64] sm:$0xf] %v1080
        %1209 = vst [vmem:[%s243 + $0x68] sm:$0xf] %v1081
        %1210 = vst [vmem:[%s243 + $0x6c] sm:$0xf] %v1082
        %1211 = vst [vmem:[%s243 + $0x70] sm:$0xf] %v1083
        %1212 = vst [vmem:[%s243 + $0x74] sm:$0xf] %v1084
        %1213 = vst [vmem:[%s243 + $0x78] sm:$0xf] %v1085
        %1214 = vst [vmem:[%s243 + $0x7c] sm:$0xf] %v1086
        %1215 = vst [vmem:[%s243 + $0x80] sm:$0xf] %v1087
        %1216 = vst [vmem:[%s243 + $0x84] sm:$0xf] %v1088
        %1217 = vst [vmem:[%s243 + $0x88] sm:$0xf] %v1089
        %1218 = vst [vmem:[%s243 + $0x8c] sm:$0xf] %v1090
        %1219 = vst [vmem:[%s243 + $0x90] sm:$0xf] %v1091
        %1220 = vst [vmem:[%s243 + $0x94] sm:$0xf] %v1092
        %1221 = vst [vmem:[%s243 + $0x98] sm:$0xf] %v1093
        %1222 = vst [vmem:[%s243 + $0x9c] sm:$0xf] %v1094
        %1223 = vst [vmem:[%s243 + $0xa0] sm:$0xf] %v1095
        %1224 = vst [vmem:[%s243 + $0xa4] sm:$0xf] %v1096
        %1225 = vst [vmem:[%s243 + $0xa8] sm:$0xf] %v1097
        %1226 = vst [vmem:[%s243 + $0xac] sm:$0xf] %v1098
        %1227 = vst [vmem:[%s243 + $0xb0] sm:$0xf] %v1099
        %1228 = vst [vmem:[%s243 + $0xb4] sm:$0xf] %v1100
        %1229 = vst [vmem:[%s243 + $0xb8] sm:$0xf] %v1101
        %1230 = vst [vmem:[%s243 + $0xbc] sm:$0xf] %v1102
        %1231 = vst [vmem:[%s243 + $0xc0] sm:$0xf] %v1103
        %1232 = vst [vmem:[%s243 + $0xc4] sm:$0xf] %v1104
        %1233 = vst [vmem:[%s243 + $0xc8] sm:$0xf] %v1105
        %1234 = vst [vmem:[%s243 + $0xcc] sm:$0xf] %v1106
        %1235 = vst [vmem:[%s243 + $0xd0] sm:$0xf] %v1107
        %1236 = vst [vmem:[%s243 + $0xd4] sm:$0xf] %v1108
        %1237 = vst [vmem:[%s243 + $0xd8] sm:$0xf] %v1109
        %1238 = vst [vmem:[%s243 + $0xdc] sm:$0xf] %v1110
        %1239 = vst [vmem:[%s243 + $0xe0] sm:$0xf] %v1111
        %1240 = vst [vmem:[%s243 + $0xe4] sm:$0xf] %v1112
        %1241 = vst [vmem:[%s243 + $0xe8] sm:$0xf] %v1113
        %1242 = vst [vmem:[%s243 + $0xec] sm:$0xf] %v1114
        %1243 = vst [vmem:[%s243 + $0xf0] sm:$0xf] %v1115
        %1244 = vst [vmem:[%s243 + $0xf4] sm:$0xf] %v1116
        %1245 = vst [vmem:[%s243 + $0xf8] sm:$0xf] %v1117
        %1246 = vst [vmem:[%s243 + $0xfc] sm:$0xf] %v1118
        %s1247 = sand.u32 %s121, 1
        %s1248 = scalar_lea.sflag [#allocation4], %s1247
        %s1249 = sand.u32 %s121, 1
        %s1250 = smul.addr %s1249, 256
        %s1251 = scalar_lea.vmem [#allocation8], %s1250
        // Predicated region
        $region45: #{tpu_custom_call.1} parent=31 // pred_check
          %p1252 = pneg %p131
        $region46: #{tpu_custom_call.1} parent=31 // pred_check_branch
          %1254 = sbr.rel (%p1252) target = $region48
        $region47: #{tpu_custom_call.1} parent=31 // pred_region
          %s1255 = smul.u32 64, %s25
          %s1257 = ssub.s32 4096, 4096
          %1258 = vsyncadd %s1248, %s1257
          %s1259 = sadd.s32 %s26, %s1255
          %s1260 = smul.addr %s1259, 64
          %s1261 = scalar_lea.hbm %s3, %s1260
          %s1262 = sshll.u32 %s1251, 4
          %s1263 = int_to_ptr.vmem [resolvable:$true] %s1262
          %1268 = dma.vmem_to_hbm [thread:$0]  %s1263, 4096, %s1261, %s1248, 64, 64, 4
        $region48: #{tpu_custom_call.1} parent=31 // pred_fallthru
          _
      $region32: #{tpu_custom_call.1} parent=5 // pred_fallthru
        _
      %p1269 = scmp.le.s32.totalorder 2, %s16
      // Predicated region
      $region49: #{tpu_custom_call.1} parent=5 // pred_check
        %p1270 = pneg %p1269
      $region50: #{tpu_custom_call.1} parent=5 // pred_check_branch
        %1272 = sbr.rel (%p1270) target = $region52
      $region51: #{tpu_custom_call.1} parent=5 // pred_region
        %s1273 = ssub.s32 %s16, 2
        // Predicated region
        $region53: #{tpu_custom_call.1} parent=51 // pred_check
          %p1274 = pneg %p137
        $region54: #{tpu_custom_call.1} parent=51 // pred_check_branch
          %1276 = sbr.rel (%p1274) target = $region56
        $region55: #{tpu_custom_call.1} parent=51 // pred_region
          %s1277 = sand.u32 %s122, 1
          %s1278 = scalar_lea.sflag [#allocation4], %s1277
          %s1279 = sand.u32 %s122, 1
          %s1280 = smul.addr %s1279, 256
          %s1281 = scalar_lea.vmem [#allocation8], %s1280
          %1282 = dma.done %s1278, 4096
        $region56: #{tpu_custom_call.1} parent=51 // pred_fallthru
          _
      $region52: #{tpu_custom_call.1} parent=5 // pred_fallthru
        _
    $region6: #{tpu_custom_call.1} parent=1 // loop_footer
      %s20 = sadd.s32 1, %s16
    $region7: #{tpu_custom_call.1} parent=1 // loop_footer_branch
      %15 = sbr.rel target = $region3
    $region8: #{tpu_custom_call.1} parent=1 // loop_exit
      _
    %1283 = vsyncpa [#allocation3], 1
    %s1284 = scalar_lea.sflag [#allocation3], 1
    %1285 = vsyncpa %s1284, 1
    %1286 = vsyncpa [#allocation6], 1
    %1287 = vsyncpa [#allocation4], 1
    %s1288 = scalar_lea.sflag [#allocation4], 1
    %1289 = vsyncpa %s1288, 1

</llo_original>
